<compile_context>
chip_gen: v7x
topology: tpu7x:2x2x1
jax: 0.10.0
libtpu: 0.0.40
codegen_flags: <defaults>
</compile_context>

<pallas_src>
import functools

import jax
import jax.numpy as jnp
from jax.experimental import pallas as pl
from jax.experimental.pallas import tpu as pltpu

PACK = 4          # batch samples packed per 128-lane row (4 * 32 features = 128)
SUBLANES = 8      # f32 sublane granularity


def _mlp_kernel(x_ref, wh_ref, bh_ref, wo_ref, bo_ref, o_ref):
    """Fused MLP forward on one packed batch tile.

    x_ref : (TR, 128)          f32    4 samples per row
    wh_ref: (H, 128, 128)      bf16   block-diag hidden weights (resident)
    bh_ref: (H, 1, 128)        f32    tiled hidden biases        (resident)
    wo_ref: (128, 32)          bf16   block-diag output weight   (resident)
    bo_ref: (1, 32)            f32    tiled output bias          (resident)
    o_ref : (TR, 32)           f32    4 samples per row
    """
    n_hidden = wh_ref.shape[0]
    h = x_ref[...]                       # f32 tile
    for i in range(n_hidden):            # static unroll (trace-time constant)
        h = jnp.dot(h.astype(jnp.bfloat16), wh_ref[i],
                    preferred_element_type=jnp.float32) + bh_ref[i]
        h = jnp.maximum(h, 0.0)          # ReLU in f32 (no bf16 VPU on v5e)
    out = jnp.dot(h.astype(jnp.bfloat16), wo_ref[...],
                  preferred_element_type=jnp.float32) + bo_ref[...]
    o_ref[...] = out.astype(o_ref.dtype)


def linear_model_forward(x, params, *, block_batch=8192):
    """params: list of (W_t, b) with W_t shaped [in, out], b shaped [1, out].

    All hidden layers must share [in, out] = [neurons, neurons] (true here:
    in_features == neurons == 32) so they can be stacked and block-diag packed.
    """
    batch, in_features = x.shape
    hidden = params[:-1]
    w_out, b_out = params[-1]
    neurons = hidden[0][0].shape[1]
    out_features = w_out.shape[1]
    n_hidden = len(hidden)
    pack = PACK

    # ---- pack params: block-diagonal bf16 weights, tiled f32 biases ---------
    eye = jnp.eye(pack, dtype=jnp.float32)
    wh = jnp.stack([jnp.kron(eye, w) for w, _ in hidden]).astype(jnp.bfloat16)    # (H, 128, 128)
    bh = jnp.stack([jnp.tile(b, (1, pack)) for _, b in hidden]).astype(jnp.float32)  # (H, 1, 128)
    wo = jnp.kron(eye, w_out).astype(jnp.bfloat16)                                 # (128, pack*out)
    bo = jnp.tile(b_out, (1, pack)).astype(jnp.float32)                            # (1, pack*out)

    # ---- batch padding & tiling (pad lightly, derive tile from padded size) --
    row_align = pack * SUBLANES                                    # 32 samples
    padded0 = ((batch + row_align - 1) // row_align) * row_align
    rows0 = padded0 // pack                                        # multiple of 8

    target_rows = max(SUBLANES,
                      (max(block_batch, row_align) // pack) // SUBLANES * SUBLANES)
    n_tiles = pl.cdiv(rows0, target_rows)
    if n_tiles < 2 and rows0 >= 2 * SUBLANES:
        n_tiles = 2                       # feed both TensorCores on v7x; ~free elsewhere
    rows_tile = ((pl.cdiv(rows0, n_tiles) + SUBLANES - 1) // SUBLANES) * SUBLANES
    rows = n_tiles * rows_tile            # at most ~8*n_tiles rows of extra padding
    padded = rows * pack

    x_in = jnp.pad(x, ((0, padded - batch), (0, 0))) if padded != batch else x
    x_packed = x_in.reshape(rows, pack * in_features)              # free row-major reshape

    kp = pack * neurons                   # 128
    np_out = pack * out_features          # 32
    flops = 2 * rows * (n_hidden * kp * kp + kp * np_out)
    bytes_accessed = (rows * kp * 4 + rows * np_out * 4
                      + wh.size * 2 + bh.size * 4 + wo.size * 2 + bo.size * 4)

    out = pl.pallas_call(
        _mlp_kernel,
        out_shape=jax.ShapeDtypeStruct((rows, np_out), jnp.float32),
        grid=(n_tiles,),
        in_specs=[
            pl.BlockSpec((rows_tile, kp), lambda i: (i, 0)),       # x: streamed
            pl.BlockSpec(wh.shape, lambda i: (0, 0, 0)),           # resident
            pl.BlockSpec(bh.shape, lambda i: (0, 0, 0)),           # resident
            pl.BlockSpec(wo.shape, lambda i: (0, 0)),              # resident
            pl.BlockSpec(bo.shape, lambda i: (0, 0)),              # resident
        ],
        out_specs=pl.BlockSpec((rows_tile, np_out), lambda i: (i, 0)),
        compiler_params=pltpu.CompilerParams(
            dimension_semantics=("parallel",)),                    # 2 TCs on v7x
        cost_estimate=pl.CostEstimate(flops=flops, transcendentals=0,
                                      bytes_accessed=bytes_accessed),
    )(x_packed, wh, bh, wo, bo)

    out = out.reshape(padded, out_features)                        # unpack 4 samples/row
    return out[:batch] if padded != batch else out


def _xavier_uniform(key, fan_in, fan_out):
    # matches torch.nn.init.xavier_uniform_ (gain=1): U(-a, a), a = sqrt(6/(fan_in+fan_out))
    limit = (6.0 / (fan_in + fan_out)) ** 0.5
    # Return transposed weight [in, out] directly.
    return jax.random.uniform(key, (fan_in, fan_out), jnp.float32, -limit, limit)


def _default_bias(key, fan_in, fan_out):
    # matches PyTorch nn.Linear default bias init: U(-1/sqrt(fan_in), 1/sqrt(fan_in))
    bound = 1.0 / (fan_in ** 0.5)
    return jax.random.uniform(key, (1, fan_out), jnp.float32, -bound, bound)


def make_params(key, in_features, neurons, n_layers, out_features):
    dims = [in_features] + [neurons] * n_layers + [out_features]
    params = []
    for i in range(len(dims) - 1):
        key, kw, kb = jax.random.split(key, 3)
        fan_in, fan_out = dims[i], dims[i + 1]
        params.append((_xavier_uniform(kw, fan_in, fan_out),
                       _default_bias(kb, fan_in, fan_out)))
    return params


def _reference_bf16(x, params):
    # Mirrors the kernel numerics: bf16 matmul operands, f32 accumulation/bias/ReLU.
    h = x
    for i, (w, b) in enumerate(params):
        h = jnp.dot(h.astype(jnp.bfloat16), w.astype(jnp.bfloat16),
                    preferred_element_type=jnp.float32) + b
        if i < len(params) - 1:
            h = jnp.maximum(h, 0.0)
    return h


def _reference_f32(x, params):
    # Pure-f32 reference matching PyTorch nn.Linear numerics.
    h = x
    for i, (w, b) in enumerate(params):
        h = h @ w + b
        if i < len(params) - 1:
            h = jnp.maximum(h, 0.0)
    return h


if __name__ == "__main__":
    key = jax.random.PRNGKey(0)
    k_params, k_x = jax.random.split(key)

    in_features, neurons, n_layers, out_features = 32, 32, 3, 8
    params = make_params(k_params, in_features, neurons, n_layers, out_features)

    # Small tile in the demo so the multi-tile / padding path is exercised.
    fwd = jax.jit(functools.partial(linear_model_forward, block_batch=256))

    for batch in (8, 200):  # 8 -> single tile; 200 -> 2 tiles + padding
        x = jax.random.normal(jax.random.fold_in(k_x, batch),
                              (batch, in_features), jnp.float32)
        y = fwd(x, params)
        jax.block_until_ready(y)
        assert y.shape == (batch, out_features)
        # Tight check vs a reference with the same bf16-operand numerics.
        y_bf16 = _reference_bf16(x, params)
        assert jnp.allclose(y, y_bf16, atol=1e-3, rtol=1e-3), \
            f"mismatch vs bf16-matched reference at batch={batch}"
        # Loose check vs the original pure-f32 PyTorch-equivalent numerics.
        y_f32 = _reference_f32(x, params)
        assert jnp.allclose(y, y_f32, atol=1.5e-1, rtol=1e-1), \
            f"mismatch vs f32 reference at batch={batch}"

    print("KERNEL_OK")
</pallas_src>

<mosaic_0001>
module attributes {stable_mosaic.version = 11 : i64} {
  func.func @_mlp_kernel(%arg0: i32, %arg1: memref<8x128xf32, #tpu.memory_space<vmem>>, %arg2: memref<3x128x128xbf16, #tpu.memory_space<vmem>>, %arg3: memref<3x1x128xf32, #tpu.memory_space<vmem>>, %arg4: memref<128x32xbf16, #tpu.memory_space<vmem>>, %arg5: memref<1x32xf32, #tpu.memory_space<vmem>>, %arg6: memref<8x32xf32, #tpu.memory_space<vmem>>) attributes {dimension_semantics = [#tpu.dimension_semantics<parallel>], iteration_bounds = array<i64: 1>, scalar_prefetch = 0 : i64, scratch_operands = 0 : i64, tpu.core_type = #tpu.core_type<tc>, window_params = [{transform_indices = @transform_0, window_bounds = array<i64: 8, 128>}, {pipeline_mode = #tpu.pipeline_mode<synchronous>, transform_indices = @transform_1, window_bounds = array<i64: 3, 128, 128>}, {pipeline_mode = #tpu.pipeline_mode<synchronous>, transform_indices = @transform_2, window_bounds = array<i64: 3, 1, 128>}, {pipeline_mode = #tpu.pipeline_mode<synchronous>, transform_indices = @transform_3, window_bounds = array<i64: 128, 32>}, {pipeline_mode = #tpu.pipeline_mode<synchronous>, transform_indices = @transform_4, window_bounds = array<i64: 1, 32>}, {transform_indices = @transform_5, window_bounds = array<i64: 8, 32>}]} {
    %c0 = arith.constant 0 : index
    %c0_0 = arith.constant 0 : index
    %0 = vector.load %arg1[%c0, %c0_0] : memref<8x128xf32, #tpu.memory_space<vmem>>, vector<8x128xf32>
    %1 = arith.truncf %0 : vector<8x128xf32> to vector<8x128xbf16>
    %c0_1 = arith.constant 0 : index
    %c0_2 = arith.constant 0 : index
    %c0_3 = arith.constant 0 : index
    %2 = vector.load %arg2[%c0_1, %c0_2, %c0_3] : memref<3x128x128xbf16, #tpu.memory_space<vmem>>, vector<1x128x128xbf16>
    %3 = vector.shape_cast %2 : vector<1x128x128xbf16> to vector<128x128xbf16>
    %cst = arith.constant dense<0.000000e+00> : vector<8x128xf32>
    %4 = tpu.matmul %1, %3, %cst {dimension_numbers = #tpu.dot_dimension_numbers<[1], [0], [0], [1], [0, 0, 1, 1], [], []>} : vector<8x128xbf16>, vector<128x128xbf16>, vector<8x128xf32> -> vector<8x128xf32>
    %c0_4 = arith.constant 0 : index
    %c0_5 = arith.constant 0 : index
    %c0_6 = arith.constant 0 : index
    %5 = vector.load %arg3[%c0_4, %c0_5, %c0_6] : memref<3x1x128xf32, #tpu.memory_space<vmem>>, vector<1x1x128xf32>
    %6 = vector.shape_cast %5 : vector<1x1x128xf32> to vector<1x128xf32>
    %7 = vector.broadcast %6 : vector<1x128xf32> to vector<8x128xf32>
    %8 = arith.addf %4, %7 : vector<8x128xf32>
    %cst_7 = arith.constant 0.000000e+00 : f32
    %9 = vector.broadcast %cst_7 : f32 to vector<8x128xf32>
    %10 = arith.maximumf %8, %9 : vector<8x128xf32>
    %11 = arith.truncf %10 : vector<8x128xf32> to vector<8x128xbf16>
    %c1 = arith.constant 1 : index
    %c0_8 = arith.constant 0 : index
    %c0_9 = arith.constant 0 : index
    %12 = vector.load %arg2[%c1, %c0_8, %c0_9] : memref<3x128x128xbf16, #tpu.memory_space<vmem>>, vector<1x128x128xbf16>
    %13 = vector.shape_cast %12 : vector<1x128x128xbf16> to vector<128x128xbf16>
    %cst_10 = arith.constant dense<0.000000e+00> : vector<8x128xf32>
    %14 = tpu.matmul %11, %13, %cst_10 {dimension_numbers = #tpu.dot_dimension_numbers<[1], [0], [0], [1], [0, 0, 1, 1], [], []>} : vector<8x128xbf16>, vector<128x128xbf16>, vector<8x128xf32> -> vector<8x128xf32>
    %c1_11 = arith.constant 1 : index
    %c0_12 = arith.constant 0 : index
    %c0_13 = arith.constant 0 : index
    %15 = vector.load %arg3[%c1_11, %c0_12, %c0_13] : memref<3x1x128xf32, #tpu.memory_space<vmem>>, vector<1x1x128xf32>
    %16 = vector.shape_cast %15 : vector<1x1x128xf32> to vector<1x128xf32>
    %17 = vector.broadcast %16 : vector<1x128xf32> to vector<8x128xf32>
    %18 = arith.addf %14, %17 : vector<8x128xf32>
    %cst_14 = arith.constant 0.000000e+00 : f32
    %19 = vector.broadcast %cst_14 : f32 to vector<8x128xf32>
    %20 = arith.maximumf %18, %19 : vector<8x128xf32>
    %21 = arith.truncf %20 : vector<8x128xf32> to vector<8x128xbf16>
    %c2 = arith.constant 2 : index
    %c0_15 = arith.constant 0 : index
    %c0_16 = arith.constant 0 : index
    %22 = vector.load %arg2[%c2, %c0_15, %c0_16] : memref<3x128x128xbf16, #tpu.memory_space<vmem>>, vector<1x128x128xbf16>
    %23 = vector.shape_cast %22 : vector<1x128x128xbf16> to vector<128x128xbf16>
    %cst_17 = arith.constant dense<0.000000e+00> : vector<8x128xf32>
    %24 = tpu.matmul %21, %23, %cst_17 {dimension_numbers = #tpu.dot_dimension_numbers<[1], [0], [0], [1], [0, 0, 1, 1], [], []>} : vector<8x128xbf16>, vector<128x128xbf16>, vector<8x128xf32> -> vector<8x128xf32>
    %c2_18 = arith.constant 2 : index
    %c0_19 = arith.constant 0 : index
    %c0_20 = arith.constant 0 : index
    %25 = vector.load %arg3[%c2_18, %c0_19, %c0_20] : memref<3x1x128xf32, #tpu.memory_space<vmem>>, vector<1x1x128xf32>
    %26 = vector.shape_cast %25 : vector<1x1x128xf32> to vector<1x128xf32>
    %27 = vector.broadcast %26 : vector<1x128xf32> to vector<8x128xf32>
    %28 = arith.addf %24, %27 : vector<8x128xf32>
    %cst_21 = arith.constant 0.000000e+00 : f32
    %29 = vector.broadcast %cst_21 : f32 to vector<8x128xf32>
    %30 = arith.maximumf %28, %29 : vector<8x128xf32>
    %31 = arith.truncf %30 : vector<8x128xf32> to vector<8x128xbf16>
    %c0_22 = arith.constant 0 : index
    %c0_23 = arith.constant 0 : index
    %32 = vector.load %arg4[%c0_22, %c0_23] : memref<128x32xbf16, #tpu.memory_space<vmem>>, vector<128x32xbf16>
    %cst_24 = arith.constant dense<0.000000e+00> : vector<8x32xf32>
    %33 = tpu.matmul %31, %32, %cst_24 {dimension_numbers = #tpu.dot_dimension_numbers<[1], [0], [0], [1], [0, 0, 1, 1], [], []>} : vector<8x128xbf16>, vector<128x32xbf16>, vector<8x32xf32> -> vector<8x32xf32>
    %c0_25 = arith.constant 0 : index
    %c0_26 = arith.constant 0 : index
    %34 = vector.load %arg5[%c0_25, %c0_26] : memref<1x32xf32, #tpu.memory_space<vmem>>, vector<1x32xf32>
    %35 = vector.broadcast %34 : vector<1x32xf32> to vector<8x32xf32>
    %36 = arith.addf %33, %35 : vector<8x32xf32>
    %c0_27 = arith.constant 0 : index
    %c0_28 = arith.constant 0 : index
    %37 = vector.load %arg6[%c0_27, %c0_28] : memref<8x32xf32, #tpu.memory_space<vmem>>, vector<8x32xf32>
    tpu.vector_store %arg6[%c0_27, %c0_28], %36 {strides = array<i32>} : memref<8x32xf32, #tpu.memory_space<vmem>>, vector<8x32xf32>,
    return
  }
  func.func @transform_0(%arg0: i32) -> (i32, i32) {
    %c0_i32 = arith.constant 0 : i32
    %c0_i32_0 = arith.constant 0 : i32
    return %arg0, %c0_i32 : i32, i32
  }
  func.func @transform_1(%arg0: i32) -> (i32, i32, i32) {
    %c0_i32 = arith.constant 0 : i32
    %c0_i32_0 = arith.constant 0 : i32
    %c0_i32_1 = arith.constant 0 : i32
    %c0_i32_2 = arith.constant 0 : i32
    return %c0_i32, %c0_i32_0, %c0_i32_1 : i32, i32, i32
  }
  func.func @transform_2(%arg0: i32) -> (i32, i32, i32) {
    %c0_i32 = arith.constant 0 : i32
    %c0_i32_0 = arith.constant 0 : i32
    %c0_i32_1 = arith.constant 0 : i32
    %c0_i32_2 = arith.constant 0 : i32
    return %c0_i32, %c0_i32_0, %c0_i32_1 : i32, i32, i32
  }
  func.func @transform_3(%arg0: i32) -> (i32, i32) {
    %c0_i32 = arith.constant 0 : i32
    %c0_i32_0 = arith.constant 0 : i32
    %c0_i32_1 = arith.constant 0 : i32
    return %c0_i32, %c0_i32_0 : i32, i32
  }
  func.func @transform_4(%arg0: i32) -> (i32, i32) {
    %c0_i32 = arith.constant 0 : i32
    %c0_i32_0 = arith.constant 0 : i32
    %c0_i32_1 = arith.constant 0 : i32
    return %c0_i32, %c0_i32_0 : i32, i32
  }
  func.func @transform_5(%arg0: i32) -> (i32, i32) {
    %c0_i32 = arith.constant 0 : i32
    %c0_i32_0 = arith.constant 0 : i32
    return %arg0, %c0_i32 : i32, i32
  }
}

</mosaic_0001>

<llo_original>
// kernel: linear_model_forward.1
$region0: #{linear_model_forward.1}
  #allocation0 [shape = 'u32[]', space=smem, size = 0x4, offset = 0x4, fixed_abs, tag = 'smem constant byte address 0x4 - core index']
  #allocation1 [shape = 'u32[144,128]{1,0:T(1,128)}', space=vmem, size = 0x12000, scoped, tag = 'internal scratch']
  %s0 = inlined_call_operand.vmem [shape: f32[8,128], index: 0, kind: input, shape index: {}]
  %s1 = inlined_call_operand.vmem [shape: bf16[3,128,128], index: 1, kind: input, shape index: {}]
  %s2 = inlined_call_operand.vmem [shape: f32[3,1,128], index: 2, kind: input, shape index: {}]
  %s3 = inlined_call_operand.vmem [shape: bf16[128,32], index: 3, kind: input, shape index: {}]
  %s4 = inlined_call_operand.vmem [shape: f32[1,32], index: 4, kind: input, shape index: {}]
  %s5 = inlined_call_operand.vmem [shape: f32[8,32], index: 5, kind: output, shape index: {}]
  %s6 = sld [smem:[#allocation0]]
  $region30: #{linear_model_forward.1} parent=0
    _
  %s8 = ssub.s32 1, %s6
  %s9 = scalar_select 0, %s8, %s6
  // Predicated region
  $region2: #{linear_model_forward.1} parent=0 // pred_check
    _
  $region3: #{linear_model_forward.1} parent=0 // pred_check_branch
    %11 = sbr.rel (0) target = $region5
  $region4: #{linear_model_forward.1} parent=0 // pred_region
    _
  $region5: #{linear_model_forward.1} parent=0 // pred_fallthru
    _
  // Predicated region
  $region6: #{linear_model_forward.1} parent=0 // pred_check
    _
  $region7: #{linear_model_forward.1} parent=0 // pred_check_branch
    %13 = sbr.rel (0) target = $region9
  $region8: #{linear_model_forward.1} parent=0 // pred_region
    _
  $region9: #{linear_model_forward.1} parent=0 // pred_fallthru
    _
  // Predicated region
  $region10: #{linear_model_forward.1} parent=0 // pred_check
    _
  $region11: #{linear_model_forward.1} parent=0 // pred_check_branch
    %15 = sbr.rel (0) target = $region13
  $region12: #{linear_model_forward.1} parent=0 // pred_region
    _
  $region13: #{linear_model_forward.1} parent=0 // pred_fallthru
    _
  // Predicated region
  $region14: #{linear_model_forward.1} parent=0 // pred_check
    _
  $region15: #{linear_model_forward.1} parent=0 // pred_check_branch
    %17 = sbr.rel (0) target = $region17
  $region16: #{linear_model_forward.1} parent=0 // pred_region
    _
  $region17: #{linear_model_forward.1} parent=0 // pred_fallthru
    _
  // Predicated region
  $region18: #{linear_model_forward.1} parent=0 // pred_check
    _
  $region19: #{linear_model_forward.1} parent=0 // pred_check_branch
    %19 = sbr.rel (0) target = $region21
  $region20: #{linear_model_forward.1} parent=0 // pred_region
    _
  $region21: #{linear_model_forward.1} parent=0 // pred_fallthru
    _
  %v21 = vld [vmem:[%s0] sm:$0xff]
  %v22 = vpack.c.bf16 %v21, %v21
  %v23 = vld [vmem:[%s1] sm:$0xf]
  %v24 = vld [vmem:[%s1 + $0x4] sm:$0xf]
  %v25 = vld [vmem:[%s1 + $0x8] sm:$0xf]
  %v26 = vld [vmem:[%s1 + $0xc] sm:$0xf]
  %v27 = vld [vmem:[%s1 + $0x10] sm:$0xf]
  %v28 = vld [vmem:[%s1 + $0x14] sm:$0xf]
  %v29 = vld [vmem:[%s1 + $0x18] sm:$0xf]
  %v30 = vld [vmem:[%s1 + $0x1c] sm:$0xf]
  %v31 = vld [vmem:[%s1 + $0x20] sm:$0xf]
  %v32 = vld [vmem:[%s1 + $0x24] sm:$0xf]
  %v33 = vld [vmem:[%s1 + $0x28] sm:$0xf]
  %v34 = vld [vmem:[%s1 + $0x2c] sm:$0xf]
  %v35 = vld [vmem:[%s1 + $0x30] sm:$0xf]
  %v36 = vld [vmem:[%s1 + $0x34] sm:$0xf]
  %v37 = vld [vmem:[%s1 + $0x38] sm:$0xf]
  %v38 = vld [vmem:[%s1 + $0x3c] sm:$0xf]
  %v39 = vld [vmem:[%s2] sm:$0x1]
  %v41 = vlaneseq
  %v42 = vshrl.u32 %v41, 7
  %v43 = vsub.s32 0, %v42
  %v44 = vrot.slane %v39, %v43
  %v62 = vunpack.c.l.b16 %v23
  %v63 = vunpack.c.l.b16 %v24
  %v64 = vunpack.c.l.b16 %v25
  %v65 = vunpack.c.l.b16 %v26
  %v66 = vunpack.c.l.b16 %v27
  %v67 = vunpack.c.l.b16 %v28
  %v68 = vunpack.c.l.b16 %v29
  %v69 = vunpack.c.l.b16 %v30
  %v70 = vunpack.c.l.b16 %v31
  %v71 = vunpack.c.l.b16 %v32
  %v72 = vunpack.c.l.b16 %v33
  %v73 = vunpack.c.l.b16 %v34
  %v74 = vunpack.c.l.b16 %v35
  %v75 = vunpack.c.l.b16 %v36
  %v76 = vunpack.c.l.b16 %v37
  %v77 = vunpack.c.l.b16 %v38
  %v78 = vpack.c.b16 %v63, %v62
  %v79 = vpack.c.b16 %v65, %v64
  %v80 = vpack.c.b16 %v67, %v66
  %v81 = vpack.c.b16 %v69, %v68
  %v82 = vpack.c.b16 %v71, %v70
  %v83 = vpack.c.b16 %v73, %v72
  %v84 = vpack.c.b16 %v75, %v74
  %v85 = vpack.c.b16 %v77, %v76
  %94 = vmatprep.subr.bf16.mxu0 0
  %95 = vmatpush1.bf16.msra.mxu0 %v78
  %96 = vmatprep.subr.bf16.mxu0 0
  %97 = vmatpush1.bf16.msra.mxu0 %v79
  %98 = vmatprep.subr.bf16.mxu0 0
  %99 = vmatpush1.bf16.msra.mxu0 %v80
  %100 = vmatprep.subr.bf16.mxu0 0
  %101 = vmatpush1.bf16.msra.mxu0 %v81
  %102 = vmatprep.subr.bf16.mxu0 0
  %103 = vmatpush1.bf16.msra.mxu0 %v82
  %104 = vmatprep.subr.bf16.mxu0 0
  %105 = vmatpush1.bf16.msra.mxu0 %v83
  %106 = vmatprep.subr.bf16.mxu0 0
  %107 = vmatpush1.bf16.msra.mxu0 %v84
  %108 = vmatprep.subr.bf16.mxu0 0
  %109 = vmatpush1.bf16.msra.mxu0 %v85
  %110 = vmatprep.subr.bf16.mxu0 0
  %111 = vmatpush1.bf16.msra.mxu0 0
  %112 = vmatprep.subr.bf16.mxu0 0
  %113 = vmatpush1.bf16.msra.mxu0 0
  %114 = vmatprep.subr.bf16.mxu0 0
  %115 = vmatpush1.bf16.msra.mxu0 0
  %116 = vmatprep.subr.bf16.mxu0 0
  %117 = vmatpush1.bf16.msra.mxu0 0
  %118 = vmatprep.subr.bf16.mxu0 0
  %119 = vmatpush1.bf16.msra.mxu0 0
  %120 = vmatprep.subr.bf16.mxu0 0
  %121 = vmatpush1.bf16.msra.mxu0 0
  %122 = vmatprep.subr.bf16.mxu0 0
  %123 = vmatpush1.bf16.msra.mxu0 0
  %124 = vmatprep.subr.bf16.mxu0 0
  %125 = vmatpush1.bf16.msra.mxu0 0
  %126 = vmatprep.mubr.bf16.mxu0 0
  %127 = vmatmul.mubr.bf16.gmra.mrb[0].mxu0 %v22
  %v128 = vpop.f32.mrb[0].mxu0
  %v129 = vadd.f32 %v44, %v128
  %v130 = vpop.f32.mrb[0].mxu0
  %v131 = vpop.f32.mrb[0].mxu0
  %v132 = vpop.f32.mrb[0].mxu0
  %133 = vdwg.mxu0
  %v134 = vmax.f32 %v129, 0.0
  %v135 = vpack.c.bf16 %v134, %v134
  %s136 = scalar_lea.vmem %s1, 64
  %v137 = vld [vmem:[%s136] sm:$0xf]
  %v138 = vld [vmem:[%s136 + $0x4] sm:$0xf]
  %v139 = vld [vmem:[%s136 + $0x8] sm:$0xf]
  %v140 = vld [vmem:[%s136 + $0xc] sm:$0xf]
  %v141 = vld [vmem:[%s136 + $0x10] sm:$0xf]
  %v142 = vld [vmem:[%s136 + $0x14] sm:$0xf]
  %v143 = vld [vmem:[%s136 + $0x18] sm:$0xf]
  %v144 = vld [vmem:[%s136 + $0x1c] sm:$0xf]
  %v145 = vld [vmem:[%s136 + $0x20] sm:$0xf]
  %v146 = vld [vmem:[%s136 + $0x24] sm:$0xf]
  %v147 = vld [vmem:[%s136 + $0x28] sm:$0xf]
  %v148 = vld [vmem:[%s136 + $0x2c] sm:$0xf]
  %v149 = vld [vmem:[%s136 + $0x30] sm:$0xf]
  %v150 = vld [vmem:[%s136 + $0x34] sm:$0xf]
  %v151 = vld [vmem:[%s136 + $0x38] sm:$0xf]
  %v152 = vld [vmem:[%s136 + $0x3c] sm:$0xf]
  %s153 = scalar_lea.vmem %s2, 1
  %v154 = vld [vmem:[%s153] sm:$0x1]
  %v156 = vlaneseq
  %v157 = vshrl.u32 %v156, 7
  %v158 = vsub.s32 0, %v157
  %v159 = vrot.slane %v154, %v158
  %v177 = vunpack.c.l.b16 %v137
  %v178 = vunpack.c.l.b16 %v138
  %v179 = vunpack.c.l.b16 %v139
  %v180 = vunpack.c.l.b16 %v140
  %v181 = vunpack.c.l.b16 %v141
  %v182 = vunpack.c.l.b16 %v142
  %v183 = vunpack.c.l.b16 %v143
  %v184 = vunpack.c.l.b16 %v144
  %v185 = vunpack.c.l.b16 %v145
  %v186 = vunpack.c.l.b16 %v146
  %v187 = vunpack.c.l.b16 %v147
  %v188 = vunpack.c.l.b16 %v148
  %v189 = vunpack.c.l.b16 %v149
  %v190 = vunpack.c.l.b16 %v150
  %v191 = vunpack.c.l.b16 %v151
  %v192 = vunpack.c.l.b16 %v152
  %v193 = vpack.c.b16 %v178, %v177
  %v194 = vpack.c.b16 %v180, %v179
  %v195 = vpack.c.b16 %v182, %v181
  %v196 = vpack.c.b16 %v184, %v183
  %v197 = vpack.c.b16 %v186, %v185
  %v198 = vpack.c.b16 %v188, %v187
  %v199 = vpack.c.b16 %v190, %v189
  %v200 = vpack.c.b16 %v192, %v191
  %209 = vmatprep.subr.bf16.mxu0 0
  %210 = vmatpush1.bf16.msra.mxu0 %v193
  %211 = vmatprep.subr.bf16.mxu0 0
  %212 = vmatpush1.bf16.msra.mxu0 %v194
  %213 = vmatprep.subr.bf16.mxu0 0
  %214 = vmatpush1.bf16.msra.mxu0 %v195
  %215 = vmatprep.subr.bf16.mxu0 0
  %216 = vmatpush1.bf16.msra.mxu0 %v196
  %217 = vmatprep.subr.bf16.mxu0 0
  %218 = vmatpush1.bf16.msra.mxu0 %v197
  %219 = vmatprep.subr.bf16.mxu0 0
  %220 = vmatpush1.bf16.msra.mxu0 %v198
  %221 = vmatprep.subr.bf16.mxu0 0
  %222 = vmatpush1.bf16.msra.mxu0 %v199
  %223 = vmatprep.subr.bf16.mxu0 0
  %224 = vmatpush1.bf16.msra.mxu0 %v200
  %225 = vmatprep.subr.bf16.mxu0 0
  %226 = vmatpush1.bf16.msra.mxu0 0
  %227 = vmatprep.subr.bf16.mxu0 0
  %228 = vmatpush1.bf16.msra.mxu0 0
  %229 = vmatprep.subr.bf16.mxu0 0
  %230 = vmatpush1.bf16.msra.mxu0 0
  %231 = vmatprep.subr.bf16.mxu0 0
  %232 = vmatpush1.bf16.msra.mxu0 0
  %233 = vmatprep.subr.bf16.mxu0 0
  %234 = vmatpush1.bf16.msra.mxu0 0
  %235 = vmatprep.subr.bf16.mxu0 0
  %236 = vmatpush1.bf16.msra.mxu0 0
  %237 = vmatprep.subr.bf16.mxu0 0
  %238 = vmatpush1.bf16.msra.mxu0 0
  %239 = vmatprep.subr.bf16.mxu0 0
  %240 = vmatpush1.bf16.msra.mxu0 0
  %241 = vmatprep.mubr.bf16.mxu0 0
  %242 = vmatmul.mubr.bf16.gmra.mrb[0].mxu0 %v135
  %v243 = vpop.f32.mrb[0].mxu0
  %v244 = vadd.f32 %v159, %v243
  %v245 = vpop.f32.mrb[0].mxu0
  %v246 = vpop.f32.mrb[0].mxu0
  %v247 = vpop.f32.mrb[0].mxu0
  %248 = vdwg.mxu0
  %v249 = vmax.f32 %v244, 0.0
  %v250 = vpack.c.bf16 %v249, %v249
  %s251 = scalar_lea.vmem %s1, 128
  %v252 = vld [vmem:[%s251] sm:$0xf]
  %v253 = vld [vmem:[%s251 + $0x4] sm:$0xf]
  %v254 = vld [vmem:[%s251 + $0x8] sm:$0xf]
  %v255 = vld [vmem:[%s251 + $0xc] sm:$0xf]
  %v256 = vld [vmem:[%s251 + $0x10] sm:$0xf]
  %v257 = vld [vmem:[%s251 + $0x14] sm:$0xf]
  %v258 = vld [vmem:[%s251 + $0x18] sm:$0xf]
  %v259 = vld [vmem:[%s251 + $0x1c] sm:$0xf]
  %v260 = vld [vmem:[%s251 + $0x20] sm:$0xf]
  %v261 = vld [vmem:[%s251 + $0x24] sm:$0xf]
  %v262 = vld [vmem:[%s251 + $0x28] sm:$0xf]
  %v263 = vld [vmem:[%s251 + $0x2c] sm:$0xf]
  %v264 = vld [vmem:[%s251 + $0x30] sm:$0xf]
  %v265 = vld [vmem:[%s251 + $0x34] sm:$0xf]
  %v266 = vld [vmem:[%s251 + $0x38] sm:$0xf]
  %v267 = vld [vmem:[%s251 + $0x3c] sm:$0xf]
  %s268 = scalar_lea.vmem %s2, 2
  %v269 = vld [vmem:[%s268] sm:$0x1]
  %v271 = vlaneseq
  %v272 = vshrl.u32 %v271, 7
  %v273 = vsub.s32 0, %v272
  %v274 = vrot.slane %v269, %v273
  %v292 = vunpack.c.l.b16 %v252
  %v293 = vunpack.c.l.b16 %v253
  %v294 = vunpack.c.l.b16 %v254
  %v295 = vunpack.c.l.b16 %v255
  %v296 = vunpack.c.l.b16 %v256
  %v297 = vunpack.c.l.b16 %v257
  %v298 = vunpack.c.l.b16 %v258
  %v299 = vunpack.c.l.b16 %v259
  %v300 = vunpack.c.l.b16 %v260
  %v301 = vunpack.c.l.b16 %v261
  %v302 = vunpack.c.l.b16 %v262
  %v303 = vunpack.c.l.b16 %v263
  %v304 = vunpack.c.l.b16 %v264
  %v305 = vunpack.c.l.b16 %v265
  %v306 = vunpack.c.l.b16 %v266
  %v307 = vunpack.c.l.b16 %v267
  %v308 = vpack.c.b16 %v293, %v292
  %v309 = vpack.c.b16 %v295, %v294
  %v310 = vpack.c.b16 %v297, %v296
  %v311 = vpack.c.b16 %v299, %v298
  %v312 = vpack.c.b16 %v301, %v300
  %v313 = vpack.c.b16 %v303, %v302
  %v314 = vpack.c.b16 %v305, %v304
  %v315 = vpack.c.b16 %v307, %v306
  %324 = vmatprep.subr.bf16.mxu0 0
  %325 = vmatpush1.bf16.msra.mxu0 %v308
  %326 = vmatprep.subr.bf16.mxu0 0
  %327 = vmatpush1.bf16.msra.mxu0 %v309
  %328 = vmatprep.subr.bf16.mxu0 0
  %329 = vmatpush1.bf16.msra.mxu0 %v310
  %330 = vmatprep.subr.bf16.mxu0 0
  %331 = vmatpush1.bf16.msra.mxu0 %v311
  %332 = vmatprep.subr.bf16.mxu0 0
  %333 = vmatpush1.bf16.msra.mxu0 %v312
  %334 = vmatprep.subr.bf16.mxu0 0
  %335 = vmatpush1.bf16.msra.mxu0 %v313
  %336 = vmatprep.subr.bf16.mxu0 0
  %337 = vmatpush1.bf16.msra.mxu0 %v314
  %338 = vmatprep.subr.bf16.mxu0 0
  %339 = vmatpush1.bf16.msra.mxu0 %v315
  %340 = vmatprep.subr.bf16.mxu0 0
  %341 = vmatpush1.bf16.msra.mxu0 0
  %342 = vmatprep.subr.bf16.mxu0 0
  %343 = vmatpush1.bf16.msra.mxu0 0
  %344 = vmatprep.subr.bf16.mxu0 0
  %345 = vmatpush1.bf16.msra.mxu0 0
  %346 = vmatprep.subr.bf16.mxu0 0
  %347 = vmatpush1.bf16.msra.mxu0 0
  %348 = vmatprep.subr.bf16.mxu0 0
  %349 = vmatpush1.bf16.msra.mxu0 0
  %350 = vmatprep.subr.bf16.mxu0 0
  %351 = vmatpush1.bf16.msra.mxu0 0
  %352 = vmatprep.subr.bf16.mxu0 0
  %353 = vmatpush1.bf16.msra.mxu0 0
  %354 = vmatprep.subr.bf16.mxu0 0
  %355 = vmatpush1.bf16.msra.mxu0 0
  %356 = vmatprep.mubr.bf16.mxu0 0
  %357 = vmatmul.mubr.bf16.gmra.mrb[0].mxu0 %v250
  %v358 = vpop.f32.mrb[0].mxu0
  %v359 = vadd.f32 %v274, %v358
  %v360 = vpop.f32.mrb[0].mxu0
  %v361 = vpop.f32.mrb[0].mxu0
  %v362 = vpop.f32.mrb[0].mxu0
  %363 = vdwg.mxu0
  %v364 = vmax.f32 %v359, 0.0
  %v365 = vpack.c.bf16 %v364, %v364
  %v366 = vld [vmem:[%s3] sm:$0xf]
  %v367 = vld [vmem:[%s3 + $0x4] sm:$0xf]
  %v368 = vld [vmem:[%s3 + $0x8] sm:$0xf]
  %v369 = vld [vmem:[%s3 + $0xc] sm:$0xf]
  %v370 = vld [vmem:[%s3 + $0x10] sm:$0xf]
  %v371 = vld [vmem:[%s3 + $0x14] sm:$0xf]
  %v372 = vld [vmem:[%s3 + $0x18] sm:$0xf]
  %v373 = vld [vmem:[%s3 + $0x1c] sm:$0xf]
  %v374 = vld [vmem:[%s3 + $0x20] sm:$0xf]
  %v375 = vld [vmem:[%s3 + $0x24] sm:$0xf]
  %v376 = vld [vmem:[%s3 + $0x28] sm:$0xf]
  %v377 = vld [vmem:[%s3 + $0x2c] sm:$0xf]
  %v378 = vld [vmem:[%s3 + $0x30] sm:$0xf]
  %v379 = vld [vmem:[%s3 + $0x34] sm:$0xf]
  %v380 = vld [vmem:[%s3 + $0x38] sm:$0xf]
  %v381 = vld [vmem:[%s3 + $0x3c] sm:$0xf]
  %v382 = vld [vmem:[%s4] sm:$0x1]
  %v384 = vlaneseq
  %v385 = vshrl.u32 %v384, 7
  %v386 = vsub.s32 0, %v385
  %v387 = vrot.slane %v382, %v386
  %v405 = vunpack.c.l.b16 %v366
  %v406 = vunpack.c.l.b16 %v367
  %v407 = vunpack.c.l.b16 %v368
  %v408 = vunpack.c.l.b16 %v369
  %v409 = vunpack.c.l.b16 %v370
  %v410 = vunpack.c.l.b16 %v371
  %v411 = vunpack.c.l.b16 %v372
  %v412 = vunpack.c.l.b16 %v373
  %v413 = vunpack.c.l.b16 %v374
  %v414 = vunpack.c.l.b16 %v375
  %v415 = vunpack.c.l.b16 %v376
  %v416 = vunpack.c.l.b16 %v377
  %v417 = vunpack.c.l.b16 %v378
  %v418 = vunpack.c.l.b16 %v379
  %v419 = vunpack.c.l.b16 %v380
  %v420 = vunpack.c.l.b16 %v381
  %v421 = vpack.c.b16 %v406, %v405
  %v422 = vpack.c.b16 %v408, %v407
  %v423 = vpack.c.b16 %v410, %v409
  %v424 = vpack.c.b16 %v412, %v411
  %v425 = vpack.c.b16 %v414, %v413
  %v426 = vpack.c.b16 %v416, %v415
  %v427 = vpack.c.b16 %v418, %v417
  %v428 = vpack.c.b16 %v420, %v419
  %437 = vmatprep.subr.bf16.mxu0 0
  %438 = vmatpush1.bf16.msra.mxu0 %v421
  %439 = vmatprep.subr.bf16.mxu0 0
  %440 = vmatpush1.bf16.msra.mxu0 %v422
  %441 = vmatprep.subr.bf16.mxu0 0
  %442 = vmatpush1.bf16.msra.mxu0 %v423
  %443 = vmatprep.subr.bf16.mxu0 0
  %444 = vmatpush1.bf16.msra.mxu0 %v424
  %445 = vmatprep.subr.bf16.mxu0 0
  %446 = vmatpush1.bf16.msra.mxu0 %v425
  %447 = vmatprep.subr.bf16.mxu0 0
  %448 = vmatpush1.bf16.msra.mxu0 %v426
  %449 = vmatprep.subr.bf16.mxu0 0
  %450 = vmatpush1.bf16.msra.mxu0 %v427
  %451 = vmatprep.subr.bf16.mxu0 0
  %452 = vmatpush1.bf16.msra.mxu0 %v428
  %453 = vmatprep.subr.bf16.mxu0 0
  %454 = vmatpush1.bf16.msra.mxu0 0
  %455 = vmatprep.subr.bf16.mxu0 0
  %456 = vmatpush1.bf16.msra.mxu0 0
  %457 = vmatprep.subr.bf16.mxu0 0
  %458 = vmatpush1.bf16.msra.mxu0 0
  %459 = vmatprep.subr.bf16.mxu0 0
  %460 = vmatpush1.bf16.msra.mxu0 0
  %461 = vmatprep.subr.bf16.mxu0 0
  %462 = vmatpush1.bf16.msra.mxu0 0
  %463 = vmatprep.subr.bf16.mxu0 0
  %464 = vmatpush1.bf16.msra.mxu0 0
  %465 = vmatprep.subr.bf16.mxu0 0
  %466 = vmatpush1.bf16.msra.mxu0 0
  %467 = vmatprep.subr.bf16.mxu0 0
  %468 = vmatpush1.bf16.msra.mxu0 0
  %469 = vmatprep.mubr.bf16.mxu0 0
  %470 = vmatmul.mubr.bf16.gmra.mrb[0].mxu0 %v365
  %v471 = vpop.f32.mrb[0].mxu0
  %v472 = vadd.f32 %v387, %v471
  %v473 = vpop.f32.mrb[0].mxu0
  %v474 = vpop.f32.mrb[0].mxu0
  %v475 = vpop.f32.mrb[0].mxu0
  %476 = vdwg.mxu0
  %vm477 = vcmask 261120
  %478 = vst.msk [vmem:[%s5] sm:$0xff] %vm477, %v472
  // Predicated region
  $region22: #{linear_model_forward.1} parent=0 // pred_check
    _
  $region23: #{linear_model_forward.1} parent=0 // pred_check_branch
    %480 = sbr.rel (0) target = $region25
  $region24: #{linear_model_forward.1} parent=0 // pred_region
    _
  $region25: #{linear_model_forward.1} parent=0 // pred_fallthru
    _
  // Predicated region
  $region26: #{linear_model_forward.1} parent=0 // pred_check
    _
  $region27: #{linear_model_forward.1} parent=0 // pred_check_branch
    %482 = sbr.rel (0) target = $region29
  $region28: #{linear_model_forward.1} parent=0 // pred_region
    _
  $region29: #{linear_model_forward.1} parent=0 // pred_fallthru
    _

</llo_original>
